<compile_context>
chip_gen: v7x
topology: tpu7x:2x2x1
jax: 0.10.0
libtpu: 0.0.40
codegen_flags: <defaults>
</compile_context>

<pallas_src>
import numpy as np
import jax
import jax.numpy as jnp
from jax import lax
from jax.experimental import pallas as pl
from jax.experimental.pallas import tpu as pltpu


_M_ALIGN = 16  # bf16 packs 2 rows per f32 sublane -> keep row tiles 16-aligned


def _round_up(x, m):
    return ((x + m - 1) // m) * m


def _cdiv(a, b):
    return -(-a // b)


def _choose_tile_m(m, cap, align):
    """Pick (tile_m, m_pad).

    Constraints / goals (per review):
      * tile_m <= cap, multiple of `align` (bf16 sublane packing),
      * >= 2 grid steps when M allows it (v7x megacore + pipelining),
      * minimal zero-row padding waste; fewest steps on ties (amortise ~0.35us/step).
    """
    m_aligned = _round_up(max(m, 1), align)
    min_steps = max(2, _cdiv(m_aligned, cap))
    if m_aligned <= align:            # a single native tile cannot be split further
        min_steps = 1
    best = None
    for steps in range(min_steps, min_steps + 8):
        tile = _round_up(_cdiv(m_aligned, steps), align)
        if tile > cap:
            continue
        cand = (steps * tile, steps, tile)   # (padded rows, steps, tile)
        if best is None or cand < best:
            best = cand
    m_pad, _, tile_m = best
    return tile_m, m_pad


def _atan2(y, x):
    """atan2(y, x) from VPU/EUP-friendly ops only (kernel-internal).

    Cephes-style polynomial with one range reduction; divisions are done with
    pl.reciprocal(approx=True) so they land on the EUP slot instead of the VALU,
    and the final sign is applied as a bit-level copysign (pltpu.bitcast), which
    also makes atan2(-0.0, x<0) return -pi like torch.  Max abs error ~1e-4 rad.
    """
    ax = jnp.abs(x)
    ay = jnp.abs(y)
    big = jnp.maximum(ax, ay)
    small = jnp.minimum(ax, ay)
    t = small * pl.reciprocal(jnp.maximum(big, jnp.float32(1e-30)), approx=True)
    # reduce [tan(pi/8), 1] -> [-(1-tan(pi/8))/(1+tan(pi/8)), 0]
    red = t > jnp.float32(0.41421356237309503)
    u = jnp.where(red, (t - 1.0) * pl.reciprocal(t + 1.0, approx=True), t)
    z = u * u
    p = jnp.float32(8.05374449538e-2)
    p = p * z - jnp.float32(1.38776856032e-1)
    p = p * z + jnp.float32(1.99777106478e-1)
    p = p * z - jnp.float32(3.33329491539e-1)
    a = p * z * u + u                                            # atan(u)
    a = jnp.where(red, jnp.float32(np.pi / 4) + a, a)            # atan(t), t in [0,1]
    a = jnp.where(ay > ax, jnp.float32(np.pi / 2) - a, a)        # atan2(|y|,|x|) in [0,pi/2]
    a = jnp.where(x < 0, jnp.float32(np.pi) - a, a)              # in [0, pi]
    # copysign(a, y): a >= 0 here, so OR-ing in y's sign bit is exact (handles -0.0).
    sign_y = pltpu.bitcast(y, jnp.uint32) & jnp.uint32(0x80000000)
    return pltpu.bitcast(pltpu.bitcast(a, jnp.uint32) | sign_y, jnp.float32)


# -----------------------------------------------------------------------------
# Pallas kernel: fused windowed-DFT matmul (bf16 MXU) + magnitude + phase
# -----------------------------------------------------------------------------
def _stft_pallas(frames, basis, f_pad, tile_m, m_pad):
    """frames: (m_pad, n_fft) bf16; basis: (n_fft, 2*f_pad) bf16 -> (m_pad, 2*f_pad) f32."""
    n_fft = frames.shape[1]
    two_f_pad = basis.shape[1]
    assert m_pad % tile_m == 0 and two_f_pad == 2 * f_pad
    assert frames.shape[0] == m_pad

    def kernel(frames_ref, basis_ref, out_ref):
        # One MXU matmul per tile (bf16 operands, f32 accumulation); output is
        # lane-dense (f_pad % 128 == 0), packed [mag | phase].
        y = jnp.dot(frames_ref[...], basis_ref[...],
                    preferred_element_type=jnp.float32)          # (tile_m, 2*f_pad) f32
        re = y[:, :f_pad]
        im = y[:, f_pad:]
        out_ref[:, :f_pad] = jnp.sqrt(re * re + im * im)         # magnitude
        out_ref[:, f_pad:] = _atan2(im, re)                      # phase

    # Advisory cost estimate (corrected per review): bf16 operand bytes, the constant
    # basis counted once, transcendentals = sqrt + 2 approx reciprocals per bin.
    cost = pl.CostEstimate(
        flops=2 * m_pad * n_fft * two_f_pad,
        transcendentals=3 * m_pad * f_pad,
        bytes_accessed=(2 * m_pad * n_fft            # bf16 frames
                        + 2 * n_fft * two_f_pad      # bf16 basis (read once)
                        + 4 * m_pad * two_f_pad),    # f32 packed output
    )

    grid_spec = pltpu.PrefetchScalarGridSpec(
        num_scalar_prefetch=0,
        grid=(m_pad // tile_m,),
        in_specs=[
            pl.BlockSpec((tile_m, n_fft), lambda i: (i, 0)),
            # Constant weight: index_map is constant, so the pipeline does not re-DMA
            # the basis after the first grid step.
            # TODO(synk): single-buffer it (pipeline_mode=pl.Buffered(1)) to reclaim the
            #             second basis copy (~0.75 MiB at n_fft=512) once verified on
            #             the deployed jax version.
            pl.BlockSpec((n_fft, two_f_pad), lambda i: (0, 0)),
        ],
        out_specs=pl.BlockSpec((tile_m, two_f_pad), lambda i: (i, 0)),
    )
    return pl.pallas_call(
        kernel,
        out_shape=jax.ShapeDtypeStruct((m_pad, two_f_pad), jnp.float32),
        grid_spec=grid_spec,
        compiler_params=pltpu.CompilerParams(
            dimension_semantics=("parallel",),       # >=2 steps -> both v7x TCs get work
            vmem_limit_bytes=32 * 1024 * 1024,       # explicit (raises v5e's 16 MiB default)
        ),
        cost_estimate=cost,
    )(frames, basis)


# -----------------------------------------------------------------------------
# Module wrapper (parameter setup + framing glue in plain JAX)
# -----------------------------------------------------------------------------
class STFTPallas:
    def __init__(self, n_fft, hop_length, win_length, max_tile_m=1024):
        assert win_length <= n_fft
        assert max_tile_m % _M_ALIGN == 0 and max_tile_m >= _M_ALIGN
        self.n_fft = n_fft
        self.hop_length = hop_length
        self.win_length = win_length
        # 1024-row cap (review): ~9.5 MiB of double-buffered VMEM at n_fft=512/F_pad=384,
        # comfortably inside even v7x's 32 MiB scoped default.
        self.max_tile_m = max_tile_m

        # Deterministic "parameters": periodic Hann window + DFT basis.
        n = np.arange(win_length, dtype=np.float64)
        hann = 0.5 - 0.5 * np.cos(2.0 * np.pi * n / win_length)
        window = np.zeros(n_fft, dtype=np.float64)
        off = (n_fft - win_length) // 2          # torch.stft centers the window
        window[off:off + win_length] = hann

        F = n_fft // 2 + 1
        self.freq_bins = F
        self.f_pad = _round_up(F, 128)           # lane-dense output padding

        k = np.arange(F, dtype=np.float64)[None, :]           # (1, F)
        nn = np.arange(n_fft, dtype=np.float64)[:, None]      # (n_fft, 1)
        ang = 2.0 * np.pi * k * nn / n_fft
        cos_b = window[:, None] * np.cos(ang)                 # (n_fft, F)
        sin_b = -(window[:, None] * np.sin(ang))              # (n_fft, F), im = -Σ x·w·sin

        # Fused, lane-padded RHS: [ cos | 0 | -sin | 0 ] -> (n_fft, 2*F_pad), bf16 (MXU op).
        fused = np.zeros((n_fft, 2 * self.f_pad), dtype=np.float64)
        fused[:, :F] = cos_b
        fused[:, self.f_pad:self.f_pad + F] = sin_b
        self.basis = jnp.asarray(fused, dtype=jnp.bfloat16)

        # f32 copies only for the pure-JAX reference.
        self.cos_basis = jnp.asarray(cos_b, dtype=jnp.float32)
        self.sin_basis = jnp.asarray(sin_b, dtype=jnp.float32)

    def __call__(self, signal, return_packed=False):
        # signal: (B, L) float32
        B, L = signal.shape
        pad = self.n_fft // 2
        padded = jnp.pad(signal.astype(jnp.float32), ((0, 0), (pad, pad)),
                         mode="reflect")                                 # center=True
        T = 1 + L // self.hop_length
        idx = (jnp.arange(T)[:, None] * self.hop_length
               + jnp.arange(self.n_fft)[None, :])                        # (T, n_fft)
        # Framing gather emitted in bf16 (source cast first so both the read and the
        # write side of the gather are half-width -> ~2x less HBM than the f32 version).
        # TODO(synk): fully in-kernel framing (pl.ANY input + manual make_async_copy of
        #             hop-sized blocks, shifted-slice matmuls) would cut another ~n_fft/hop
        #             of HBM traffic; left as a follow-up.
        frames = padded.astype(jnp.bfloat16)[:, idx]                     # (B, T, n_fft) bf16

        # Flatten B*T into the matmul M axis; tile with >=2 grid steps and minimal padding.
        M = B * T
        frames = frames.reshape(M, self.n_fft)
        tile_m, m_pad = _choose_tile_m(M, self.max_tile_m, _M_ALIGN)
        if m_pad != M:
            frames = jnp.pad(frames, ((0, m_pad - M), (0, 0)))

        packed = _stft_pallas(frames, self.basis, self.f_pad, tile_m, m_pad)  # (m_pad, 2*F_pad)

        slab = packed[:M].reshape(B, T, 2, self.f_pad)
        if return_packed:
            # Lane-dense [mag | phase] slab for a (future) ported downstream consumer —
            # avoids the 2/128-lane-occupancy relayout of the torch (..., 2) layout.
            return slab

        # Torch-shaped API boundary:
        # (B, T, 2, F_pad) -> slice F -> (B, F, T, 2) -> (B, 1, F, T, 2)
        out = slab[..., :self.freq_bins]
        mix = jnp.transpose(out, (0, 3, 1, 2))                           # (B, F, T, 2)
        return mix[:, None]                                              # (B, 1, F, T, 2)


# -----------------------------------------------------------------------------
# Pure-JAX f32 reference (sanity check)
# -----------------------------------------------------------------------------
def _reference(signal, mod: STFTPallas):
    pad = mod.n_fft // 2
    padded = jnp.pad(signal, ((0, 0), (pad, pad)), mode="reflect")
    L = signal.shape[1]
    T = 1 + L // mod.hop_length
    idx = jnp.arange(T)[:, None] * mod.hop_length + jnp.arange(mod.n_fft)[None, :]
    frames = padded[:, idx]
    re = jnp.einsum("btn,nf->btf", frames, mod.cos_basis,
                    precision=lax.Precision.HIGHEST)
    im = jnp.einsum("btn,nf->btf", frames, mod.sin_basis,
                    precision=lax.Precision.HIGHEST)
    mag = jnp.sqrt(re * re + im * im)
    phase = jnp.arctan2(im, re)
    mix = jnp.stack((jnp.transpose(mag, (0, 2, 1)),
                     jnp.transpose(phase, (0, 2, 1))), axis=-1)
    return mix[:, None]


if __name__ == "__main__":
    n_fft, hop_length, win_length = 32, 8, 32
    B, L = 2, 128

    key = jax.random.PRNGKey(0)
    signal = jax.random.normal(key, (B, L), dtype=jnp.float32)

    mod = STFTPallas(n_fft, hop_length, win_length)
    out = jax.block_until_ready(mod(signal))
    ref = jax.block_until_ready(_reference(signal, mod))

    F = n_fft // 2 + 1
    T = 1 + L // hop_length
    assert out.shape == (B, 1, F, T, 2), out.shape
    assert out.dtype == jnp.float32

    out_np = np.asarray(out)
    ref_np = np.asarray(ref)
    mag_o, ph_o = out_np[..., 0], out_np[..., 1]
    mag_r, ph_r = ref_np[..., 0], ref_np[..., 1]

    # Magnitude: bf16 MXU operands introduce ~0.2-0.4% relative operand rounding
    # (f32 accumulation), so compare against the f32 reference with a matching tolerance.
    np.testing.assert_allclose(mag_o, mag_r, rtol=3e-2, atol=6e-2)

    # Phase: only meaningful where the bin has energy (bf16 rounding makes near-zero-
    # magnitude phase ill-conditioned).  Compare as a wrapped angle difference.
    mask = mag_r > 1.0
    assert int(mask.sum()) > 100
    dphi = np.abs(np.angle(np.exp(1j * (ph_o - ph_r))))
    max_err = float(dphi[mask].max())
    assert max_err < 0.15, max_err

    print("KERNEL_OK")
</pallas_src>

<mosaic_0001>
module attributes {stable_mosaic.version = 11 : i64} {
  func.func @kernel(%arg0: i32, %arg1: memref<16x32xbf16, #tpu.memory_space<vmem>>, %arg2: memref<32x256xbf16, #tpu.memory_space<vmem>>, %arg3: memref<16x256xf32, #tpu.memory_space<vmem>>) attributes {dimension_semantics = [#tpu.dimension_semantics<parallel>], iteration_bounds = array<i64: 3>, scalar_prefetch = 0 : i64, scratch_operands = 0 : i64, tpu.core_type = #tpu.core_type<tc>, window_params = [{transform_indices = @transform_0, window_bounds = array<i64: 16, 32>}, {pipeline_mode = #tpu.pipeline_mode<synchronous>, transform_indices = @transform_1, window_bounds = array<i64: 32, 256>}, {transform_indices = @transform_2, window_bounds = array<i64: 16, 256>}]} {
    %c0 = arith.constant 0 : index
    %c0_0 = arith.constant 0 : index
    %0 = vector.load %arg1[%c0, %c0_0] : memref<16x32xbf16, #tpu.memory_space<vmem>>, vector<16x32xbf16>
    %c0_1 = arith.constant 0 : index
    %c0_2 = arith.constant 0 : index
    %1 = vector.load %arg2[%c0_1, %c0_2] : memref<32x256xbf16, #tpu.memory_space<vmem>>, vector<32x256xbf16>
    %cst = arith.constant dense<0.000000e+00> : vector<16x256xf32>
    %2 = tpu.matmul %0, %1, %cst {dimension_numbers = #tpu.dot_dimension_numbers<[1], [0], [0], [1], [0, 0, 1, 1], [], []>} : vector<16x32xbf16>, vector<32x256xbf16>, vector<16x256xf32> -> vector<16x256xf32>
    %3 = vector.extract_strided_slice %2 {offsets = [0, 0], sizes = [16, 128], strides = [1, 1]} : vector<16x256xf32> to vector<16x128xf32>
    %4 = vector.extract_strided_slice %2 {offsets = [0, 128], sizes = [16, 128], strides = [1, 1]} : vector<16x256xf32> to vector<16x128xf32>
    %5 = arith.mulf %3, %3 : vector<16x128xf32>
    %6 = arith.mulf %4, %4 : vector<16x128xf32>
    %7 = arith.addf %5, %6 : vector<16x128xf32>
    %8 = math.sqrt %7 : vector<16x128xf32>
    %c0_3 = arith.constant 0 : index
    %c0_4 = arith.constant 0 : index
    %9 = vector.load %arg3[%c0_3, %c0_4] : memref<16x256xf32, #tpu.memory_space<vmem>>, vector<16x128xf32>
    tpu.vector_store %arg3[%c0_3, %c0_4], %8 {strides = array<i32>} : memref<16x256xf32, #tpu.memory_space<vmem>>, vector<16x128xf32>,
    %10 = math.absf %3 : vector<16x128xf32>
    %11 = math.absf %4 : vector<16x128xf32>
    %12 = arith.maximumf %10, %11 : vector<16x128xf32>
    %13 = arith.minimumf %10, %11 : vector<16x128xf32>
    %cst_5 = arith.constant 1.000000e-30 : f32
    %14 = vector.broadcast %cst_5 : f32 to vector<16x128xf32>
    %15 = arith.maximumf %12, %14 : vector<16x128xf32>
    %16 = tpu.reciprocal %15 {approx = true} : vector<16x128xf32> -> vector<16x128xf32>
    %17 = arith.mulf %13, %16 : vector<16x128xf32>
    %cst_6 = arith.constant 0.414213568 : f32
    %18 = vector.broadcast %cst_6 : f32 to vector<16x128xf32>
    %19 = arith.cmpf ogt, %17, %18 : vector<16x128xf32>
    %cst_7 = arith.constant 1.000000e+00 : f32
    %20 = vector.broadcast %cst_7 : f32 to vector<16x128xf32>
    %21 = arith.subf %17, %20 : vector<16x128xf32>
    %cst_8 = arith.constant 1.000000e+00 : f32
    %22 = vector.broadcast %cst_8 : f32 to vector<16x128xf32>
    %23 = arith.addf %17, %22 : vector<16x128xf32>
    %24 = tpu.reciprocal %23 {approx = true} : vector<16x128xf32> -> vector<16x128xf32>
    %25 = arith.mulf %21, %24 : vector<16x128xf32>
    %26 = arith.select %19, %25, %17 : vector<16x128xi1>, vector<16x128xf32>
    %27 = arith.mulf %26, %26 : vector<16x128xf32>
    %cst_9 = arith.constant 0.0805374458 : f32
    %28 = vector.broadcast %cst_9 : f32 to vector<16x128xf32>
    %29 = arith.mulf %28, %27 : vector<16x128xf32>
    %cst_10 = arith.constant 0.138776854 : f32
    %30 = vector.broadcast %cst_10 : f32 to vector<16x128xf32>
    %31 = arith.subf %29, %30 : vector<16x128xf32>
    %32 = arith.mulf %31, %27 : vector<16x128xf32>
    %cst_11 = arith.constant 0.199777111 : f32
    %33 = vector.broadcast %cst_11 : f32 to vector<16x128xf32>
    %34 = arith.addf %32, %33 : vector<16x128xf32>
    %35 = arith.mulf %34, %27 : vector<16x128xf32>
    %cst_12 = arith.constant 0.333329499 : f32
    %36 = vector.broadcast %cst_12 : f32 to vector<16x128xf32>
    %37 = arith.subf %35, %36 : vector<16x128xf32>
    %38 = arith.mulf %37, %27 : vector<16x128xf32>
    %39 = arith.mulf %38, %26 : vector<16x128xf32>
    %40 = arith.addf %39, %26 : vector<16x128xf32>
    %cst_13 = arith.constant 0.785398185 : f32
    %41 = vector.broadcast %cst_13 : f32 to vector<16x128xf32>
    %42 = arith.addf %41, %40 : vector<16x128xf32>
    %43 = arith.select %19, %42, %40 : vector<16x128xi1>, vector<16x128xf32>
    %44 = arith.cmpf ogt, %11, %10 : vector<16x128xf32>
    %cst_14 = arith.constant 1.57079637 : f32
    %45 = vector.broadcast %cst_14 : f32 to vector<16x128xf32>
    %46 = arith.subf %45, %43 : vector<16x128xf32>
    %47 = arith.select %44, %46, %43 : vector<16x128xi1>, vector<16x128xf32>
    %cst_15 = arith.constant 0.000000e+00 : f32
    %48 = vector.broadcast %cst_15 : f32 to vector<16x128xf32>
    %49 = arith.cmpf olt, %3, %48 : vector<16x128xf32>
    %cst_16 = arith.constant 3.14159274 : f32
    %50 = vector.broadcast %cst_16 : f32 to vector<16x128xf32>
    %51 = arith.subf %50, %47 : vector<16x128xf32>
    %52 = arith.select %49, %51, %47 : vector<16x128xi1>, vector<16x128xf32>
    %53 = tpu.bitcast %4 : vector<16x128xf32> -> vector<16x128xi32>
    %c-2147483648_i32 = arith.constant -2147483648 : i32
    %54 = vector.broadcast %c-2147483648_i32 : i32 to vector<16x128xi32>
    %55 = arith.andi %53, %54 : vector<16x128xi32>
    %56 = tpu.bitcast %52 : vector<16x128xf32> -> vector<16x128xi32>
    %57 = arith.ori %56, %55 : vector<16x128xi32>
    %58 = tpu.bitcast %57 : vector<16x128xi32> -> vector<16x128xf32>
    %c0_17 = arith.constant 0 : index
    %c128 = arith.constant 128 : index
    %59 = vector.load %arg3[%c0_17, %c128] : memref<16x256xf32, #tpu.memory_space<vmem>>, vector<16x128xf32>
    tpu.vector_store %arg3[%c0_17, %c128], %58 {strides = array<i32>} : memref<16x256xf32, #tpu.memory_space<vmem>>, vector<16x128xf32>,
    return
  }
  func.func @transform_0(%arg0: i32) -> (i32, i32) {
    %c0_i32 = arith.constant 0 : i32
    %c0_i32_0 = arith.constant 0 : i32
    return %arg0, %c0_i32 : i32, i32
  }
  func.func @transform_1(%arg0: i32) -> (i32, i32) {
    %c0_i32 = arith.constant 0 : i32
    %c0_i32_0 = arith.constant 0 : i32
    %c0_i32_1 = arith.constant 0 : i32
    return %c0_i32, %c0_i32_0 : i32, i32
  }
  func.func @transform_2(%arg0: i32) -> (i32, i32) {
    %c0_i32 = arith.constant 0 : i32
    %c0_i32_0 = arith.constant 0 : i32
    return %arg0, %c0_i32 : i32, i32
  }
}

</mosaic_0001>

<llo_original>
// kernel: tpu_custom_call.1
$region0: #{tpu_custom_call.1}
  #allocation0 [shape = 'u32[]', space=smem, size = 0x4, offset = 0x4, fixed_abs, tag = 'smem constant byte address 0x4 - core index']
  #allocation1 [shape = 'u32[144,128]{1,0:T(1,128)}', space=vmem, size = 0x12000, scoped, tag = 'internal scratch']
  %s0 = inlined_call_operand.vmem [shape: bf16[48,32], index: 0, kind: input, shape index: {}]
  %s1 = inlined_call_operand.vmem [shape: bf16[32,256], index: 1, kind: input, shape index: {}]
  %s2 = inlined_call_operand.hbm [shape: f32[48,256], index: 2, kind: output, shape index: {}]
  %s3 = sld [smem:[#allocation0]]
  $region41: #{tpu_custom_call.1} parent=0
    _
  %s5 = ssub.s32 1, %s3
  %s6 = scalar_select 0, %s5, %s3
  $region1: #{tpu_custom_call.1} parent=0
    #allocation2 [shape = 'u8[32768]{0}', space=vmem, size = 0x8000, scoped, tag = 'output window, operand 0']
    #allocation3 [shape = 's32[2]{0}', space=sflag, size = 0x8, scoped, tag = 'scoped memory for tpu_custom_call.1']
    %7 = vsyncpa [#allocation3], 0
    %s8 = scalar_lea.sflag [#allocation3], 1
    %9 = vsyncpa %s8, 0
    loop: start=0, step=1, limit=5
    $region2: #{tpu_custom_call.1} parent=1 // loop_pre_header
      _
    $region3: #{tpu_custom_call.1} parent=1 // loop_header
      %s11 = sphi 0, %s15
      %p12 = scmp.ge.s32.totalorder %s11, 5
      %s21 = sphi 0, %s23
      %s24 = sphi 0, %s21
      %s25 = sphi 0, %s24
      %s41 = sphi 0, %s25
      %s45 = sphi 0, %s45
      %s47 = sphi 0, %s45
      %s48 = sphi 0, %s47
      %s62 = sphi 0, %s48
      %s68 = sphi 0, %s70
      %s71 = sphi 0, %s68
      %s72 = sphi 0, %s71
      %s88 = sphi 0, %s72
    $region4: #{tpu_custom_call.1} parent=1 // loop_header_branch
      %14 = sbr.rel (%p12) target = $region8
    $region5: #{tpu_custom_call.1} parent=1 // loop_body
      %s16 = ssub.s32 %s11, 1
      %s17 = ssub.s32 %s11, 2
      %s18 = sadd.s32 %s11, 1
      %s19 = ssub.s32 %s11, %s18
      %p20 = scmp.eq.s32.totalorder %s19, 0
      %s22 = sadd.s32 %s21, 1
      %s23 = scalar_select %p20, %s21, %s22
      %p26 = pneg %p20
      %p27 = scmp.eq.s32.totalorder %s11, 2
      %p28 = por %p26, %p27
      %p29 = scmp.ne.s32.totalorder %s21, %s24
      %p30 = scmp.eq.s32.totalorder %s11, 0
      %p31 = por %p29, %p30
      %p32 = scmp.ne.s32.totalorder %s21, %s24
      %p33 = scmp.eq.s32.totalorder %s16, 2
      %p34 = por %p32, %p33
      %p35 = scmp.ne.s32.totalorder %s24, %s25
      %p36 = scmp.eq.s32.totalorder %s16, 0
      %p37 = por %p35, %p36
      %p38 = scmp.ne.s32.totalorder %s24, %s25
      %p39 = scmp.eq.s32.totalorder %s17, 2
      %p40 = por %p38, %p39
      %p42 = scmp.ne.s32.totalorder %s25, %s41
      %p43 = scmp.eq.s32.totalorder %s17, 0
      %p44 = por %p42, %p43
      %s46 = sadd.s32 %s45, 1
      %p49 = scmp.eq.s32.totalorder %s11, 2
      %p50 = scmp.ne.s32.totalorder %s45, %s47
      %p51 = scmp.eq.s32.totalorder %s11, 0
      %p52 = por %p50, %p51
      %p53 = scmp.ne.s32.totalorder %s45, %s47
      %p54 = scmp.eq.s32.totalorder %s16, 2
      %p55 = por %p53, %p54
      %p56 = scmp.ne.s32.totalorder %s47, %s48
      %p57 = scmp.eq.s32.totalorder %s16, 0
      %p58 = por %p56, %p57
      %p59 = scmp.ne.s32.totalorder %s47, %s48
      %p60 = scmp.eq.s32.totalorder %s17, 2
      %p61 = por %p59, %p60
      %p63 = scmp.ne.s32.totalorder %s48, %s62
      %p64 = scmp.eq.s32.totalorder %s17, 0
      %p65 = por %p63, %p64
      %s66 = ssub.s32 %s11, %s18
      %p67 = scmp.eq.s32.totalorder %s66, 0
      %s69 = sadd.s32 %s68, 1
      %s70 = scalar_select %p67, %s68, %s69
      %p73 = pneg %p67
      %p74 = scmp.eq.s32.totalorder %s11, 2
      %p75 = por %p73, %p74
      %p76 = scmp.ne.s32.totalorder %s68, %s71
      %p77 = scmp.eq.s32.totalorder %s11, 0
      %p78 = por %p76, %p77
      %p79 = scmp.ne.s32.totalorder %s68, %s71
      %p80 = scmp.eq.s32.totalorder %s16, 2
      %p81 = por %p79, %p80
      %p82 = scmp.ne.s32.totalorder %s71, %s72
      %p83 = scmp.eq.s32.totalorder %s16, 0
      %p84 = por %p82, %p83
      %p85 = scmp.ne.s32.totalorder %s71, %s72
      %p86 = scmp.eq.s32.totalorder %s17, 2
      %p87 = por %p85, %p86
      %p89 = scmp.ne.s32.totalorder %s72, %s88
      %p90 = scmp.eq.s32.totalorder %s17, 0
      %p91 = por %p89, %p90
      %p92 = scmp.le.s32.totalorder 1, %s11
      %p93 = scmp.lt.s32.totalorder %s11, 4
      %p94 = pnand %p92, %p93
      %p95 = pneg %p94
      // Predicated region
      $region9: #{tpu_custom_call.1} parent=5 // pred_check
        _
      $region10: #{tpu_custom_call.1} parent=5 // pred_check_branch
        %97 = sbr.rel (%p94) target = $region12
      $region11: #{tpu_custom_call.1} parent=5 // pred_region
        %s98 = ssub.s32 %s11, 1
        // Predicated region
        $region13: #{tpu_custom_call.1} parent=11 // pred_check
          %p99 = pneg %p58
        $region14: #{tpu_custom_call.1} parent=11 // pred_check_branch
          %101 = sbr.rel (%p99) target = $region16
        $region15: #{tpu_custom_call.1} parent=11 // pred_region
          _
        $region16: #{tpu_custom_call.1} parent=11 // pred_fallthru
          _
      $region12: #{tpu_custom_call.1} parent=5 // pred_fallthru
        _
      %p102 = scmp.lt.s32.totalorder %s11, 3
      // Predicated region
      $region17: #{tpu_custom_call.1} parent=5 // pred_check
        %p103 = pneg %p102
      $region18: #{tpu_custom_call.1} parent=5 // pred_check_branch
        %105 = sbr.rel (%p103) target = $region20
      $region19: #{tpu_custom_call.1} parent=5 // pred_region
        // Predicated region
        $region21: #{tpu_custom_call.1} parent=19 // pred_check
          %p106 = pneg %p31
        $region22: #{tpu_custom_call.1} parent=19 // pred_check_branch
          %108 = sbr.rel (%p106) target = $region24
        $region23: #{tpu_custom_call.1} parent=19 // pred_region
          %s109 = smul.u32 2, %s11
          %p110 = scmp.lt.s32.totalorder %s109, 5
          %s111 = scalar_select %p110, %s109, 5
          %s112 = smul.addr %s111, 4
          %s113 = scalar_lea.vmem %s0, %s112
          %s114 = smul.u32 2, %s11
        $region24: #{tpu_custom_call.1} parent=19 // pred_fallthru
          _
      $region20: #{tpu_custom_call.1} parent=5 // pred_fallthru
        _
      %p115 = scmp.le.s32.totalorder 1, %s11
      %p116 = scmp.lt.s32.totalorder %s11, 4
      %p117 = pnand %p115, %p116
      %p118 = pneg %p117
      // Predicated region
      $region25: #{tpu_custom_call.1} parent=5 // pred_check
        _
      $region26: #{tpu_custom_call.1} parent=5 // pred_check_branch
        %120 = sbr.rel (%p117) target = $region28
      $region27: #{tpu_custom_call.1} parent=5 // pred_region
        %s121 = ssub.s32 %s11, 1
        %s122 = smul.u32 2, %s16
        %p123 = scmp.lt.s32.totalorder %s122, 5
        %s124 = scalar_select %p123, %s122, 5
        %s125 = smul.addr %s124, 4
        %s126 = scalar_lea.vmem %s0, %s125
        %p127 = pneg %p37
        %p128 = pneg %p34
        %p129 = pneg %p58
        %p130 = pneg %p55
        %p131 = pneg %p84
        %p132 = pneg %p81
        %s133 = sand.u32 %s71, 1
        %s134 = scalar_lea.sflag [#allocation3], %s133
        %s135 = sand.u32 %s71, 1
        %s136 = smul.addr %s135, 32
        %s137 = scalar_lea.vmem [#allocation2], %s136
        %s138 = smul.u32 2, %s16
        %p139 = scmp.lt.s32.totalorder %s138, 5
        %s140 = scalar_select %p139, %s138, 5
        %s141 = smul.addr %s140, 4
        %s142 = scalar_lea.vmem %s0, %s141
        %s143 = smul.u32 2, %s16
        %s144 = smul.u32 2, %s16
        %v146 = vld [vmem:[%s142] sm:$0xf]
        %v147 = vld [vmem:[%s142 + $0x4] sm:$0xf]
        %v148 = vld [vmem:[%s1] sm:$0xff]
        %v149 = vld [vmem:[%s1 + $0x8] sm:$0xff]
        %v150 = vld [vmem:[%s1 + $0x10] sm:$0xff]
        %v151 = vld [vmem:[%s1 + $0x18] sm:$0xff]
        %v154 = vunpack.c.l.b16 %v146
        %v155 = vunpack.c.l.b16 %v147
        %v156 = vpack.c.b16 %v155, %v154
        %v161 = vunpack.c.l.b16 %v148
        %v162 = vunpack.c.h.b16 %v148
        %v163 = vunpack.c.l.b16 %v149
        %v164 = vunpack.c.h.b16 %v149
        %v165 = vunpack.c.l.b16 %v150
        %v166 = vunpack.c.h.b16 %v150
        %v167 = vunpack.c.l.b16 %v151
        %v168 = vunpack.c.h.b16 %v151
        %v169 = vpack.c.b16 %v163, %v161
        %v170 = vpack.c.b16 %v164, %v162
        %v171 = vpack.c.b16 %v167, %v165
        %v172 = vpack.c.b16 %v168, %v166
        %vm177 = vcmask 261120
        %v179 = vsel %vm177, %v156, 0
        %181 = vmatprep.subr.bf16.mxu0 %v170
        %182 = vmatpush1.bf16.msra.mxu0 %v169
        %183 = vmatprep.subr.bf16.mxu0 %v172
        %184 = vmatpush1.bf16.msra.mxu0 %v171
        %185 = vmatprep.subr.bf16.mxu0 0
        %186 = vmatpush1.bf16.msra.mxu0 0
        %187 = vmatprep.subr.bf16.mxu0 0
        %188 = vmatpush1.bf16.msra.mxu0 0
        %189 = vmatprep.subr.bf16.mxu0 0
        %190 = vmatpush1.bf16.msra.mxu0 0
        %191 = vmatprep.subr.bf16.mxu0 0
        %192 = vmatpush1.bf16.msra.mxu0 0
        %193 = vmatprep.subr.bf16.mxu0 0
        %194 = vmatpush1.bf16.msra.mxu0 0
        %195 = vmatprep.subr.bf16.mxu0 0
        %196 = vmatpush1.bf16.msra.mxu0 0
        %197 = vmatprep.subr.bf16.mxu0 0
        %198 = vmatpush1.bf16.msra.mxu0 0
        %199 = vmatprep.subr.bf16.mxu0 0
        %200 = vmatpush1.bf16.msra.mxu0 0
        %201 = vmatprep.subr.bf16.mxu0 0
        %202 = vmatpush1.bf16.msra.mxu0 0
        %203 = vmatprep.subr.bf16.mxu0 0
        %204 = vmatpush1.bf16.msra.mxu0 0
        %205 = vmatprep.subr.bf16.mxu0 0
        %206 = vmatpush1.bf16.msra.mxu0 0
        %207 = vmatprep.subr.bf16.mxu0 0
        %208 = vmatpush1.bf16.msra.mxu0 0
        %209 = vmatprep.subr.bf16.mxu0 0
        %210 = vmatpush1.bf16.msra.mxu0 0
        %211 = vmatprep.subr.bf16.mxu0 0
        %212 = vmatpush1.bf16.msra.mxu0 0
        %213 = vmatprep.mubr.bf16.mxu0 0
        %214 = vmatmul.mubr.bf16.gmra.mrb[0].mxu0 %v179
        %v215 = vpop.f32.mrb[0].mxu0
        %v216 = vadd.f32 0.0, %v215
        %v217 = vpop.f32.mrb[0].mxu0
        %v218 = vadd.f32 0.0, %v217
        %v219 = vpop.f32.mrb[0].mxu0
        %v220 = vadd.f32 0.0, %v219
        %v221 = vpop.f32.mrb[0].mxu0
        %v222 = vadd.f32 0.0, %v221
        %223 = vdwg.mxu0
        %v224 = vmul.f32 %v216, %v216
        %v225 = vmul.f32 %v220, %v220
        %v226 = vmul.f32 %v218, %v218
        %v227 = vmul.f32 %v222, %v222
        %v228 = vadd.f32 %v224, %v226
        %v229 = vadd.f32 %v225, %v227
        %v230 = vrsqrt.pop %v228
        %v231 = vmul.f32 %v228, %v230
        %vm232 = vcmp.eq.f32.partialorder %v228, inf
        %v233 = vsel %vm232, %v228, %v231
        %vm234 = vcmp.eq.f32.partialorder %v228, 0.0
        %v235 = vand.u32 %v228, 2147483648
        %v236 = vsel %vm234, %v235, %v233
        %v237 = vrsqrt.pop %v229
        %v238 = vmul.f32 %v229, %v237
        %vm239 = vcmp.eq.f32.partialorder %v229, inf
        %v240 = vsel %vm239, %v229, %v238
        %vm241 = vcmp.eq.f32.partialorder %v229, 0.0
        %v242 = vand.u32 %v229, 2147483648
        %v243 = vsel %vm241, %v242, %v240
        %244 = vst [vmem:[%s137] sm:$0xff] %v236
        %245 = vst [vmem:[%s137 + $0x10] sm:$0xff] %v243
        %v246 = vand.u32 2147483647, %v216
        %v247 = vand.u32 2147483647, %v220
        %v248 = vand.u32 2147483647, %v218
        %v249 = vand.u32 2147483647, %v222
        %v250 = vmax.f32 %v246, %v248
        %v251 = vmax.f32 %v247, %v249
        %v252 = vmin.f32 %v246, %v248
        %v253 = vmin.f32 %v247, %v249
        %v254 = vmax.f32 %v250, 1e-30
        %v255 = vmax.f32 %v251, 1e-30
        %v256 = vrcp.pop %v254
        %v257 = vrcp.pop %v255
        %v258 = vmul.f32 %v252, %v256
        %v259 = vmul.f32 %v253, %v257
        %vm260 = vcmp.gt.f32.partialorder %v258, 0.41421357
        %vm261 = vcmp.gt.f32.partialorder %v259, 0.41421357
        %v262 = vsub.f32 %v258, 1.0
        %v263 = vsub.f32 %v259, 1.0
        %v264 = vadd.f32 %v258, 1.0
        %v265 = vadd.f32 %v259, 1.0
        %v266 = vrcp.pop %v264
        %v267 = vrcp.pop %v265
        %v268 = vmul.f32 %v262, %v266
        %v269 = vmul.f32 %v263, %v267
        %v270 = vsel %vm260, %v268, %v258
        %v271 = vsel %vm261, %v269, %v259
        %v272 = vmul.f32 %v270, %v270
        %v273 = vmul.f32 %v271, %v271
        %v274 = vmul.f32 %v272, 0.080537446
        %v275 = vmul.f32 %v273, 0.080537446
        %v276 = vsub.f32 %v274, 0.13877685
        %v277 = vsub.f32 %v275, 0.13877685
        %v278 = vmul.f32 %v276, %v272
        %v279 = vmul.f32 %v277, %v273
        %v280 = vadd.f32 %v278, 0.19977711
        %v281 = vadd.f32 %v279, 0.19977711
        %v282 = vmul.f32 %v280, %v272
        %v283 = vmul.f32 %v281, %v273
        %v284 = vsub.f32 %v282, 0.3333295
        %v285 = vsub.f32 %v283, 0.3333295
        %v286 = vmul.f32 %v284, %v272
        %v287 = vmul.f32 %v285, %v273
        %v288 = vmul.f32 %v286, %v270
        %v289 = vmul.f32 %v287, %v271
        %v290 = vadd.f32 %v288, %v270
        %v291 = vadd.f32 %v289, %v271
        %v292 = vadd.f32 %v290, 0.7853982
        %v293 = vadd.f32 %v291, 0.7853982
        %v294 = vsel %vm260, %v292, %v290
        %v295 = vsel %vm261, %v293, %v291
        %vm296 = vcmp.gt.f32.partialorder %v248, %v246
        %vm297 = vcmp.gt.f32.partialorder %v249, %v247
        %v298 = vsub.f32 1.5707964, %v294
        %v299 = vsub.f32 1.5707964, %v295
        %v300 = vsel %vm296, %v298, %v294
        %v301 = vsel %vm297, %v299, %v295
        %vm302 = vcmp.lt.f32.partialorder %v216, 0.0
        %vm303 = vcmp.lt.f32.partialorder %v220, 0.0
        %v304 = vsub.f32 3.1415927, %v300
        %v305 = vsub.f32 3.1415927, %v301
        %v306 = vsel %vm302, %v304, %v300
        %v307 = vsel %vm303, %v305, %v301
        %v310 = vand.u32 %v218, 2147483648
        %v311 = vand.u32 %v222, 2147483648
        %v314 = vor.u32 %v306, %v310
        %v315 = vor.u32 %v307, %v311
        %318 = vst [vmem:[%s137 + $0x8] sm:$0xff] %v314
        %319 = vst [vmem:[%s137 + $0x18] sm:$0xff] %v315
        %s320 = sand.u32 %s71, 1
        %s321 = scalar_lea.sflag [#allocation3], %s320
        %s322 = sand.u32 %s71, 1
        %s323 = smul.addr %s322, 32
        %s324 = scalar_lea.vmem [#allocation2], %s323
        // Predicated region
        $region29: #{tpu_custom_call.1} parent=27 // pred_check
          %p325 = pneg %p81
        $region30: #{tpu_custom_call.1} parent=27 // pred_check_branch
          %327 = sbr.rel (%p325) target = $region32
        $region31: #{tpu_custom_call.1} parent=27 // pred_region
          %s328 = smul.u32 2, %s16
          %s330 = ssub.s32 512, 512
          %331 = vsyncadd %s321, %s330
          %s332 = smul.addr %s328, 2
          %s333 = smul.addr %s332, 128
          %s334 = scalar_lea.hbm %s2, %s333
          %s335 = sshll.u32 %s324, 4
          %s336 = int_to_ptr.vmem [resolvable:$true] %s335
          %341 = dma.vmem_to_hbm [thread:$0]  %s336, 512, %s334, %s321, 256, 256, 16
        $region32: #{tpu_custom_call.1} parent=27 // pred_fallthru
          _
      $region28: #{tpu_custom_call.1} parent=5 // pred_fallthru
        _
      %p342 = scmp.le.s32.totalorder 2, %s11
      // Predicated region
      $region33: #{tpu_custom_call.1} parent=5 // pred_check
        %p343 = pneg %p342
      $region34: #{tpu_custom_call.1} parent=5 // pred_check_branch
        %345 = sbr.rel (%p343) target = $region36
      $region35: #{tpu_custom_call.1} parent=5 // pred_region
        %s346 = ssub.s32 %s11, 2
        // Predicated region
        $region37: #{tpu_custom_call.1} parent=35 // pred_check
          %p347 = pneg %p87
        $region38: #{tpu_custom_call.1} parent=35 // pred_check_branch
          %349 = sbr.rel (%p347) target = $region40
        $region39: #{tpu_custom_call.1} parent=35 // pred_region
          %s350 = sand.u32 %s72, 1
          %s351 = scalar_lea.sflag [#allocation3], %s350
          %s352 = sand.u32 %s72, 1
          %s353 = smul.addr %s352, 32
          %s354 = scalar_lea.vmem [#allocation2], %s353
          %355 = dma.done %s351, 512
        $region40: #{tpu_custom_call.1} parent=35 // pred_fallthru
          _
      $region36: #{tpu_custom_call.1} parent=5 // pred_fallthru
        _
    $region6: #{tpu_custom_call.1} parent=1 // loop_footer
      %s15 = sadd.s32 1, %s11
    $region7: #{tpu_custom_call.1} parent=1 // loop_footer_branch
      %10 = sbr.rel target = $region3
    $region8: #{tpu_custom_call.1} parent=1 // loop_exit
      _
    %356 = vsyncpa [#allocation3], 1
    %s357 = scalar_lea.sflag [#allocation3], 1
    %358 = vsyncpa %s357, 1

</llo_original>
